<compile_context>
chip_gen: v7x
topology: tpu7x:2x2x1
jax: 0.10.0
libtpu: 0.0.40
codegen_flags: <defaults>
</compile_context>

<pallas_src>
import functools

import jax
import jax.numpy as jnp
from jax.experimental import pallas as pl
from jax.experimental.pallas import tpu as pltpu

BN_EPS = 1e-5

# Tile caps (chosen for v6e/v7x MXU; also legal & fast on v5e).
TM_CAP = 256
TN_CAP = 256
TK_CAP = 512


def _rup(x, m):
    return (x + m - 1) // m * m


# ----------------------------------------------------------------------------
# Pallas GEMM kernel: (M,K)bf16 @ (K,N)bf16 + bias[N], f32 accumulation.
# Bias is folded into the accumulator init (k == 0), epilogue is just a cast.
# ----------------------------------------------------------------------------
def _matmul_bias_kernel(a_ref, b_ref, bias_ref, o_ref, acc_ref):
    @pl.when(pl.program_id(2) == 0)
    def _():
        acc_ref[...] = jnp.broadcast_to(bias_ref[...], acc_ref.shape)

    acc_ref[...] += jnp.dot(a_ref[...], b_ref[...],
                            preferred_element_type=jnp.float32)

    @pl.when(pl.program_id(2) == pl.num_programs(2) - 1)
    def _():
        o_ref[...] = acc_ref[...].astype(o_ref.dtype)


def _gemm_bias(patches, wm, bias):
    """patches: (M, K) f32;  wm: (Kp, Np) bf16 pre-padded;  bias: (1, Np) f32."""
    M, K = patches.shape
    Kp, Np = wm.shape

    # Shape-adaptive tiles (all Python ints — shapes are static under jit).
    tm = min(TM_CAP, _rup(M, 16))          # 16-sublane aligned for bf16 packing
    tn = min(TN_CAP, Np)                   # Np was built as a multiple of tn
    tk = min(TK_CAP, Kp)
    while Kp % tk:                         # make tk divide Kp (both multiples of 128)
        tk -= 128

    Mp = _rup(M, tm)
    a_p = jnp.pad(patches, ((0, Mp - M), (0, Kp - K))).astype(jnp.bfloat16)

    out = pl.pallas_call(
        _matmul_bias_kernel,
        out_shape=jax.ShapeDtypeStruct((Mp, Np), jnp.float32),
        grid_spec=pltpu.PrefetchScalarGridSpec(
            num_scalar_prefetch=0,
            grid=(Mp // tm, Np // tn, Kp // tk),
            in_specs=[pl.BlockSpec((tm, tk), lambda i, j, k: (i, k)),
                      pl.BlockSpec((tk, tn), lambda i, j, k: (k, j)),
                      pl.BlockSpec((1, tn), lambda i, j, k: (0, j))],
            out_specs=pl.BlockSpec((tm, tn), lambda i, j, k: (i, j)),
            scratch_shapes=[pltpu.VMEM((tm, tn), jnp.float32)]),
        compiler_params=pltpu.CompilerParams(
            dimension_semantics=("parallel", "parallel", "arbitrary")),
    )(a_p, wm, bias)
    return out[:M, :Np]


# ----------------------------------------------------------------------------
# im2col glue (plain JAX, fused into the same jit as the pallas_call).
# K ordering is (Cin, kh, kw) to match w.reshape(Cout, Cin*kh*kw).
# ----------------------------------------------------------------------------
def _im2col(x, kh, kw, stride, pad):
    B, C, H, W = x.shape
    xp = jnp.pad(x, ((0, 0), (0, 0), (pad, pad), (pad, pad)))
    Ho = (H + 2 * pad - kh) // stride + 1
    Wo = (W + 2 * pad - kw) // stride + 1
    cols = []
    for i in range(kh):
        for j in range(kw):
            cols.append(xp[:, :, i:i + stride * Ho:stride, j:j + stride * Wo:stride])
    patches = jnp.stack(cols, axis=2)                           # (B, C, kh*kw, Ho, Wo)
    patches = patches.transpose(0, 3, 4, 1, 2).reshape(B * Ho * Wo, C * kh * kw)
    return patches, Ho, Wo


# ----------------------------------------------------------------------------
# Parameter prep (runs once, outside the hot path): fold eval-mode BN into the
# conv weight/bias, lay the weight out as a padded bf16 (Kp, Np) GEMM matrix.
# ----------------------------------------------------------------------------
def prepare_convbn_params(w, gamma, beta, mean, var, eps=BN_EPS):
    Cout, Cin, kh, kw = w.shape
    scale = gamma / jnp.sqrt(var + eps)
    wf = (w * scale[:, None, None, None]).reshape(Cout, Cin * kh * kw).T   # (K, N)
    bf = beta - mean * scale                                               # (N,)

    K, N = Cin * kh * kw, Cout
    tn = min(TN_CAP, _rup(N, 128))
    Np = _rup(N, tn)
    Kp = _rup(K, 128)
    wm = jnp.pad(wf, ((0, Kp - K), (0, Np - N))).astype(jnp.bfloat16)
    bias = jnp.pad(bf, (0, Np - N)).reshape(1, Np).astype(jnp.float32)
    return wm, bias


# ----------------------------------------------------------------------------
# Forward: ConvBn2d(x) == BN(Conv(x)), eval mode.  Whole thing is one jit, so
# im2col / pads / transposes fuse around the single pallas_call.
# ----------------------------------------------------------------------------
@functools.partial(jax.jit, static_argnames=("kh", "kw", "stride", "pad", "cout"))
def convbn_forward(x, wm, bias, *, kh, kw, stride, pad, cout):
    B, Cin, H, W = x.shape
    patches, Ho, Wo = _im2col(x, kh, kw, stride, pad)        # (M, K)
    out = _gemm_bias(patches, wm, bias)                      # (M, Np) lane-dense
    out = out[:, :cout]                                      # (M, Cout)
    return out.reshape(B, Ho, Wo, cout).transpose(0, 3, 1, 2)  # NCHW


# ----------------------------------------------------------------------------
# Pure-JAX reference (f32) for a sanity check.
# ----------------------------------------------------------------------------
def _reference_convbn(x, w, gamma, beta, mean, var, stride, pad, eps=BN_EPS):
    y = jax.lax.conv_general_dilated(
        x, w, window_strides=(stride, stride),
        padding=[(pad, pad), (pad, pad)],
        dimension_numbers=("NCHW", "OIHW", "NCHW"))
    scale = gamma / jnp.sqrt(var + eps)
    return y * scale[None, :, None, None] + (beta - mean * scale)[None, :, None, None]


if __name__ == "__main__":
    key = jax.random.PRNGKey(0)
    k1, k2, k3, k4, k5, k6 = jax.random.split(key, 6)

    B, Cin, H, W = 2, 4, 16, 16
    Cout, kh, kw = 8, 3, 3
    stride, pad = 1, 1

    x = jax.random.normal(k1, (B, Cin, H, W), jnp.float32)
    w = jax.random.normal(k2, (Cout, Cin, kh, kw), jnp.float32) / jnp.sqrt(Cin * kh * kw)
    gamma = 1.0 + 0.1 * jax.random.normal(k3, (Cout,), jnp.float32)
    beta = 0.1 * jax.random.normal(k4, (Cout,), jnp.float32)
    mean = 0.1 * jax.random.normal(k5, (Cout,), jnp.float32)
    var = 0.5 + jax.random.uniform(k6, (Cout,), jnp.float32)

    wm, bias = prepare_convbn_params(w, gamma, beta, mean, var)
    out = convbn_forward(x, wm, bias, kh=kh, kw=kw, stride=stride, pad=pad, cout=Cout)
    out = jax.block_until_ready(out)

    assert out.shape == (B, Cout, H, W), out.shape
    assert bool(jnp.all(jnp.isfinite(out)))
    ref = _reference_convbn(x, w, gamma, beta, mean, var, stride, pad)
    err = float(jnp.max(jnp.abs(out - ref)))
    assert err < 1e-1, f"max abs err {err} (bf16 MXU inputs, f32 accumulation)"
    print("KERNEL_OK")
</pallas_src>

<mosaic_0001>
module attributes {stable_mosaic.version = 11 : i64} {
  func.func @_matmul_bias_kernel(%arg0: i32, %arg1: i32, %arg2: i32, %arg3: memref<256x128xbf16, #tpu.memory_space<vmem>>, %arg4: memref<128x128xbf16, #tpu.memory_space<vmem>>, %arg5: memref<1x128xf32, #tpu.memory_space<vmem>>, %arg6: memref<256x128xf32, #tpu.memory_space<vmem>>, %arg7: memref<256x128xf32, #tpu.memory_space<vmem>>) attributes {dimension_semantics = [#tpu.dimension_semantics<parallel>, #tpu.dimension_semantics<parallel>, #tpu.dimension_semantics<arbitrary>], iteration_bounds = array<i64: 2, 1, 1>, scalar_prefetch = 0 : i64, scratch_operands = 1 : i64, tpu.core_type = #tpu.core_type<tc>, window_params = [{transform_indices = @transform_0, window_bounds = array<i64: 256, 128>}, {transform_indices = @transform_1, window_bounds = array<i64: 128, 128>}, {transform_indices = @transform_2, window_bounds = array<i64: 1, 128>}, {transform_indices = @transform_3, window_bounds = array<i64: 256, 128>}]} {
    %c0_i32 = arith.constant 0 : i32
    %0 = arith.cmpi eq, %arg2, %c0_i32 : i32
    %1 = arith.extui %0 : i1 to i32
    %c0_i32_0 = arith.constant 0 : i32
    %2 = arith.cmpi ne, %1, %c0_i32_0 : i32
    scf.if %2 {
      %c0_10 = arith.constant 0 : index
      %c0_11 = arith.constant 0 : index
      %12 = vector.load %arg5[%c0_10, %c0_11] : memref<1x128xf32, #tpu.memory_space<vmem>>, vector<1x128xf32>
      %13 = vector.shape_cast %12 : vector<1x128xf32> to vector<1x128xf32>
      %14 = vector.broadcast %13 : vector<1x128xf32> to vector<256x128xf32>
      %c0_12 = arith.constant 0 : index
      %c0_13 = arith.constant 0 : index
      %15 = vector.load %arg7[%c0_12, %c0_13] : memref<256x128xf32, #tpu.memory_space<vmem>>, vector<256x128xf32>
      tpu.vector_store %arg7[%c0_12, %c0_13], %14 {strides = array<i32>} : memref<256x128xf32, #tpu.memory_space<vmem>>, vector<256x128xf32>,
    } else {
    }
    %c0 = arith.constant 0 : index
    %c0_1 = arith.constant 0 : index
    %3 = vector.load %arg7[%c0, %c0_1] : memref<256x128xf32, #tpu.memory_space<vmem>>, vector<256x128xf32>
    %c0_2 = arith.constant 0 : index
    %c0_3 = arith.constant 0 : index
    %4 = vector.load %arg3[%c0_2, %c0_3] : memref<256x128xbf16, #tpu.memory_space<vmem>>, vector<256x128xbf16>
    %c0_4 = arith.constant 0 : index
    %c0_5 = arith.constant 0 : index
    %5 = vector.load %arg4[%c0_4, %c0_5] : memref<128x128xbf16, #tpu.memory_space<vmem>>, vector<128x128xbf16>
    %cst = arith.constant dense<0.000000e+00> : vector<256x128xf32>
    %6 = tpu.matmul %4, %5, %cst {dimension_numbers = #tpu.dot_dimension_numbers<[1], [0], [0], [1], [0, 0, 1, 1], [], []>} : vector<256x128xbf16>, vector<128x128xbf16>, vector<256x128xf32> -> vector<256x128xf32>
    %7 = arith.addf %3, %6 : vector<256x128xf32>
    %c0_6 = arith.constant 0 : index
    %c0_7 = arith.constant 0 : index
    %8 = vector.load %arg7[%c0_6, %c0_7] : memref<256x128xf32, #tpu.memory_space<vmem>>, vector<256x128xf32>
    tpu.vector_store %arg7[%c0_6, %c0_7], %7 {strides = array<i32>} : memref<256x128xf32, #tpu.memory_space<vmem>>, vector<256x128xf32>,
    %c0_i32_8 = arith.constant 0 : i32
    %9 = arith.cmpi eq, %arg2, %c0_i32_8 : i32
    %10 = arith.extui %9 : i1 to i32
    %c0_i32_9 = arith.constant 0 : i32
    %11 = arith.cmpi ne, %10, %c0_i32_9 : i32
    scf.if %11 {
      %c0_10 = arith.constant 0 : index
      %c0_11 = arith.constant 0 : index
      %12 = vector.load %arg7[%c0_10, %c0_11] : memref<256x128xf32, #tpu.memory_space<vmem>>, vector<256x128xf32>
      %c0_12 = arith.constant 0 : index
      %c0_13 = arith.constant 0 : index
      %13 = vector.load %arg6[%c0_12, %c0_13] : memref<256x128xf32, #tpu.memory_space<vmem>>, vector<256x128xf32>
      tpu.vector_store %arg6[%c0_12, %c0_13], %12 {strides = array<i32>} : memref<256x128xf32, #tpu.memory_space<vmem>>, vector<256x128xf32>,
    } else {
    }
    return
  }
  func.func @transform_0(%arg0: i32, %arg1: i32, %arg2: i32) -> (i32, i32) {
    %c0_i32 = arith.constant 0 : i32
    return %arg0, %arg2 : i32, i32
  }
  func.func @transform_1(%arg0: i32, %arg1: i32, %arg2: i32) -> (i32, i32) {
    %c0_i32 = arith.constant 0 : i32
    return %arg2, %arg1 : i32, i32
  }
  func.func @transform_2(%arg0: i32, %arg1: i32, %arg2: i32) -> (i32, i32) {
    %c0_i32 = arith.constant 0 : i32
    %c0_i32_0 = arith.constant 0 : i32
    return %c0_i32, %arg1 : i32, i32
  }
  func.func @transform_3(%arg0: i32, %arg1: i32, %arg2: i32) -> (i32, i32) {
    %c0_i32 = arith.constant 0 : i32
    return %arg0, %arg1 : i32, i32
  }
}

</mosaic_0001>

<llo_original>
// kernel: convbn_forward.1
$region0: #{convbn_forward.1}
  #allocation0 [shape = 'u32[]', space=smem, size = 0x4, offset = 0x4, fixed_abs, tag = 'smem constant byte address 0x4 - core index']
  #allocation1 [shape = 'u32[144,128]{1,0:T(1,128)}', space=vmem, size = 0x12000, scoped, tag = 'internal scratch']
  #allocation2 [shape = 'f32[256,128]{1,0:T(8,128)}', space=vmem, size = 0x20000, scoped, tag = 'scratch operand']
  %s0 = inlined_call_operand.vmem [shape: bf16[512,128], index: 0, kind: input, shape index: {}]
  %s1 = inlined_call_operand.vmem [shape: bf16[128,128], index: 1, kind: input, shape index: {}]
  %s2 = inlined_call_operand.vmem [shape: f32[1,128], index: 2, kind: input, shape index: {}]
  %s3 = inlined_call_operand.vmem [shape: f32[512,128], index: 3, kind: output, shape index: {}]
  %s4 = sld [smem:[#allocation0]]
  $region53: #{convbn_forward.1} parent=0
    _
  %s6 = ssub.s32 1, %s4
  %s7 = scalar_select 0, %s6, %s4
  loop: start=0, step=1, limit=4
  $region2: #{convbn_forward.1} parent=0 // loop_pre_header
    _
  $region3: #{convbn_forward.1} parent=0 // loop_header
    %s9 = sphi 0, %s13
    %p10 = scmp.ge.s32.totalorder %s9, 4
    %s16 = sphi 0, %s35
    %s17 = sphi 0, %s31
    %s18 = sphi 0, %s27
    %s19 = sphi 0, %s16
    %s20 = sphi 0, %s17
    %s21 = sphi 0, %s18
    %s22 = sphi 0, %s19
    %s23 = sphi 0, %s20
    %s24 = sphi 0, %s21
    %s40 = sphi 0, %s42
    %s43 = sphi 0, %s40
    %s44 = sphi 0, %s43
    %s60 = sphi 0, %s44
    %s68 = sphi 0, %s70
    %s71 = sphi 0, %s68
    %s72 = sphi 0, %s71
    %s88 = sphi 0, %s72
    %s94 = sphi 0, %s96
    %s97 = sphi 0, %s94
    %s98 = sphi 0, %s97
    %s114 = sphi 0, %s98
    %s122 = sphi 0, %s124
    %s125 = sphi 0, %s122
    %s126 = sphi 0, %s125
    %s142 = sphi 0, %s126
  $region4: #{convbn_forward.1} parent=0 // loop_header_branch
    %12 = sbr.rel (%p10) target = $region8
  $region5: #{convbn_forward.1} parent=0 // loop_body
    %s14 = ssub.s32 %s9, 1
    %s15 = ssub.s32 %s9, 2
    %s25 = sadd.s32 1, %s18
    %p26 = scmp.ge.s32.totalorder %s25, 1
    %s27 = scalar_select %p26, 0, %s25
    %s28 = sadd.s32 1, %s17
    %s29 = scalar_select %p26, %s28, %s17
    %p30 = scmp.ge.s32.totalorder %s29, 1
    %s31 = scalar_select %p30, 0, %s29
    %s32 = sadd.s32 1, %s16
    %s33 = scalar_select %p30, %s32, %s16
    %p34 = scmp.ge.s32.totalorder %s33, 2
    %s35 = scalar_select %p34, 0, %s33
    %s36 = ssub.s32 %s16, %s35
    %s37 = ssub.s32 %s18, %s27
    %s38 = sor.u32 %s36, %s37
    %p39 = scmp.eq.s32.totalorder %s38, 0
    %s41 = sadd.s32 %s40, 1
    %s42 = scalar_select %p39, %s40, %s41
    %p45 = pneg %p39
    %p46 = scmp.eq.s32.totalorder %s9, 1
    %p47 = por %p45, %p46
    %p48 = scmp.ne.s32.totalorder %s40, %s43
    %p49 = scmp.eq.s32.totalorder %s9, 0
    %p50 = por %p48, %p49
    %p51 = scmp.ne.s32.totalorder %s40, %s43
    %p52 = scmp.eq.s32.totalorder %s14, 1
    %p53 = por %p51, %p52
    %p54 = scmp.ne.s32.totalorder %s43, %s44
    %p55 = scmp.eq.s32.totalorder %s14, 0
    %p56 = por %p54, %p55
    %p57 = scmp.ne.s32.totalorder %s43, %s44
    %p58 = scmp.eq.s32.totalorder %s15, 1
    %p59 = por %p57, %p58
    %p61 = scmp.ne.s32.totalorder %s44, %s60
    %p62 = scmp.eq.s32.totalorder %s15, 0
    %p63 = por %p61, %p62
    %s64 = ssub.s32 %s18, %s27
    %s65 = ssub.s32 %s17, %s31
    %s66 = sor.u32 %s64, %s65
    %p67 = scmp.eq.s32.totalorder %s66, 0
    %s69 = sadd.s32 %s68, 1
    %s70 = scalar_select %p67, %s68, %s69
    %p73 = pneg %p67
    %p74 = scmp.eq.s32.totalorder %s9, 1
    %p75 = por %p73, %p74
    %p76 = scmp.ne.s32.totalorder %s68, %s71
    %p77 = scmp.eq.s32.totalorder %s9, 0
    %p78 = por %p76, %p77
    %p79 = scmp.ne.s32.totalorder %s68, %s71
    %p80 = scmp.eq.s32.totalorder %s14, 1
    %p81 = por %p79, %p80
    %p82 = scmp.ne.s32.totalorder %s71, %s72
    %p83 = scmp.eq.s32.totalorder %s14, 0
    %p84 = por %p82, %p83
    %p85 = scmp.ne.s32.totalorder %s71, %s72
    %p86 = scmp.eq.s32.totalorder %s15, 1
    %p87 = por %p85, %p86
    %p89 = scmp.ne.s32.totalorder %s72, %s88
    %p90 = scmp.eq.s32.totalorder %s15, 0
    %p91 = por %p89, %p90
    %s92 = ssub.s32 %s17, %s31
    %p93 = scmp.eq.s32.totalorder %s92, 0
    %s95 = sadd.s32 %s94, 1
    %s96 = scalar_select %p93, %s94, %s95
    %p99 = pneg %p93
    %p100 = scmp.eq.s32.totalorder %s9, 1
    %p101 = por %p99, %p100
    %p102 = scmp.ne.s32.totalorder %s94, %s97
    %p103 = scmp.eq.s32.totalorder %s9, 0
    %p104 = por %p102, %p103
    %p105 = scmp.ne.s32.totalorder %s94, %s97
    %p106 = scmp.eq.s32.totalorder %s14, 1
    %p107 = por %p105, %p106
    %p108 = scmp.ne.s32.totalorder %s97, %s98
    %p109 = scmp.eq.s32.totalorder %s14, 0
    %p110 = por %p108, %p109
    %p111 = scmp.ne.s32.totalorder %s97, %s98
    %p112 = scmp.eq.s32.totalorder %s15, 1
    %p113 = por %p111, %p112
    %p115 = scmp.ne.s32.totalorder %s98, %s114
    %p116 = scmp.eq.s32.totalorder %s15, 0
    %p117 = por %p115, %p116
    %s118 = ssub.s32 %s16, %s35
    %s119 = ssub.s32 %s17, %s31
    %s120 = sor.u32 %s118, %s119
    %p121 = scmp.eq.s32.totalorder %s120, 0
    %s123 = sadd.s32 %s122, 1
    %s124 = scalar_select %p121, %s122, %s123
    %p127 = pneg %p121
    %p128 = scmp.eq.s32.totalorder %s9, 1
    %p129 = por %p127, %p128
    %p130 = scmp.ne.s32.totalorder %s122, %s125
    %p131 = scmp.eq.s32.totalorder %s9, 0
    %p132 = por %p130, %p131
    %p133 = scmp.ne.s32.totalorder %s122, %s125
    %p134 = scmp.eq.s32.totalorder %s14, 1
    %p135 = por %p133, %p134
    %p136 = scmp.ne.s32.totalorder %s125, %s126
    %p137 = scmp.eq.s32.totalorder %s14, 0
    %p138 = por %p136, %p137
    %p139 = scmp.ne.s32.totalorder %s125, %s126
    %p140 = scmp.eq.s32.totalorder %s15, 1
    %p141 = por %p139, %p140
    %p143 = scmp.ne.s32.totalorder %s126, %s142
    %p144 = scmp.eq.s32.totalorder %s15, 0
    %p145 = por %p143, %p144
    %p146 = scmp.le.s32.totalorder 1, %s9
    %p147 = scmp.lt.s32.totalorder %s9, 3
    %p148 = pnand %p146, %p147
    %p149 = pneg %p148
    // Predicated region
    $region9: #{convbn_forward.1} parent=5 // pred_check
      _
    $region10: #{convbn_forward.1} parent=5 // pred_check_branch
      %151 = sbr.rel (%p148) target = $region12
    $region11: #{convbn_forward.1} parent=5 // pred_region
      %s152 = ssub.s32 %s9, 1
      // Predicated region
      $region13: #{convbn_forward.1} parent=11 // pred_check
        %p153 = pneg %p84
      $region14: #{convbn_forward.1} parent=11 // pred_check_branch
        %155 = sbr.rel (%p153) target = $region16
      $region15: #{convbn_forward.1} parent=11 // pred_region
        %s156 = smul.u32 16, %s21
        %p157 = scmp.lt.s32.totalorder %s156, 15
        %s158 = scalar_select %p157, %s156, 15
        %p159 = scmp.lt.s32.totalorder %s20, 0
        %s160 = scalar_select %p159, %s20, 0
        %s161 = sadd.s32 %s160, %s158
        %s162 = smul.addr %s161, 4
        %s163 = scalar_lea.vmem %s1, %s162
        %s164 = smul.u32 16, %s21
      $region16: #{convbn_forward.1} parent=11 // pred_fallthru
        _
      // Predicated region
      $region17: #{convbn_forward.1} parent=11 // pred_check
        %p165 = pneg %p110
      $region18: #{convbn_forward.1} parent=11 // pred_check_branch
        %167 = sbr.rel (%p165) target = $region20
      $region19: #{convbn_forward.1} parent=11 // pred_region
        %p168 = scmp.lt.s32.totalorder %s20, 0
        %s169 = scalar_select %p168, %s20, 0
        %s170 = scalar_lea.vmem %s2, %s169
      $region20: #{convbn_forward.1} parent=11 // pred_fallthru
        _
    $region12: #{convbn_forward.1} parent=5 // pred_fallthru
      _
    %p171 = scmp.lt.s32.totalorder %s9, 2
    // Predicated region
    $region21: #{convbn_forward.1} parent=5 // pred_check
      %p172 = pneg %p171
    $region22: #{convbn_forward.1} parent=5 // pred_check_branch
      %174 = sbr.rel (%p172) target = $region24
    $region23: #{convbn_forward.1} parent=5 // pred_region
      // Predicated region
      $region25: #{convbn_forward.1} parent=23 // pred_check
        %p175 = pneg %p50
      $region26: #{convbn_forward.1} parent=23 // pred_check_branch
        %177 = sbr.rel (%p175) target = $region28
      $region27: #{convbn_forward.1} parent=23 // pred_region
        %s178 = smul.u32 32, %s16
        %p179 = scmp.lt.s32.totalorder %s178, 63
        %s180 = scalar_select %p179, %s178, 63
        %p181 = scmp.lt.s32.totalorder %s18, 0
        %s182 = scalar_select %p181, %s18, 0
        %s183 = sadd.s32 %s182, %s180
        %s184 = smul.addr %s183, 4
        %s185 = scalar_lea.vmem %s0, %s184
        %s186 = smul.u32 32, %s16
      $region28: #{convbn_forward.1} parent=23 // pred_fallthru
        _
    $region24: #{convbn_forward.1} parent=5 // pred_fallthru
      _
    %p187 = scmp.le.s32.totalorder 1, %s9
    %p188 = scmp.lt.s32.totalorder %s9, 3
    %p189 = pnand %p187, %p188
    %p190 = pneg %p189
    // Predicated region
    $region29: #{convbn_forward.1} parent=5 // pred_check
      _
    $region30: #{convbn_forward.1} parent=5 // pred_check_branch
      %192 = sbr.rel (%p189) target = $region32
    $region31: #{convbn_forward.1} parent=5 // pred_region
      %s193 = ssub.s32 %s9, 1
      %s194 = smul.u32 32, %s19
      %p195 = scmp.lt.s32.totalorder %s194, 63
      %s196 = scalar_select %p195, %s194, 63
      %p197 = scmp.lt.s32.totalorder %s21, 0
      %s198 = scalar_select %p197, %s21, 0
      %s199 = sadd.s32 %s198, %s196
      %s200 = smul.addr %s199, 4
      %s201 = scalar_lea.vmem %s0, %s200
      %p202 = pneg %p56
      %p203 = pneg %p53
      %s204 = smul.u32 16, %s21
      %p205 = scmp.lt.s32.totalorder %s204, 15
      %s206 = scalar_select %p205, %s204, 15
      %p207 = scmp.lt.s32.totalorder %s20, 0
      %s208 = scalar_select %p207, %s20, 0
      %s209 = sadd.s32 %s208, %s206
      %s210 = smul.addr %s209, 4
      %s211 = scalar_lea.vmem %s1, %s210
      %p212 = pneg %p84
      %p213 = pneg %p81
      %p214 = scmp.lt.s32.totalorder %s20, 0
      %s215 = scalar_select %p214, %s20, 0
      %s216 = scalar_lea.vmem %s2, %s215
      %p217 = pneg %p110
      %p218 = pneg %p107
      %p219 = pneg %p138
      %p220 = pneg %p135
      %s221 = smul.u32 32, %s19
      %p222 = scmp.lt.s32.totalorder %s221, 63
      %s223 = scalar_select %p222, %s221, 63
      %p224 = scmp.lt.s32.totalorder %s20, 0
      %s225 = scalar_select %p224, %s20, 0
      %s226 = sadd.s32 %s225, %s223
      %s227 = smul.addr %s226, 8
      %s228 = scalar_lea.vmem %s3, %s227
      %s229 = smul.u32 32, %s19
      %p230 = scmp.lt.s32.totalorder %s229, 63
      %s231 = scalar_select %p230, %s229, 63
      %p232 = scmp.lt.s32.totalorder %s21, 0
      %s233 = scalar_select %p232, %s21, 0
      %s234 = sadd.s32 %s233, %s231
      %s235 = smul.addr %s234, 4
      %s236 = scalar_lea.vmem %s0, %s235
      %s237 = smul.u32 32, %s19
      %s238 = smul.u32 16, %s21
      %p239 = scmp.lt.s32.totalorder %s238, 15
      %s240 = scalar_select %p239, %s238, 15
      %p241 = scmp.lt.s32.totalorder %s20, 0
      %s242 = scalar_select %p241, %s20, 0
      %s243 = sadd.s32 %s242, %s240
      %s244 = smul.addr %s243, 4
      %s245 = scalar_lea.vmem %s1, %s244
      %s246 = smul.u32 16, %s21
      %p247 = scmp.lt.s32.totalorder %s20, 0
      %s248 = scalar_select %p247, %s20, 0
      %s249 = scalar_lea.vmem %s2, %s248
      %s250 = smul.u32 32, %s19
      %p251 = scmp.lt.s32.totalorder %s250, 63
      %s252 = scalar_select %p251, %s250, 63
      %p253 = scmp.lt.s32.totalorder %s20, 0
      %s254 = scalar_select %p253, %s20, 0
      %s255 = sadd.s32 %s254, %s252
      %s256 = smul.addr %s255, 8
      %s257 = scalar_lea.vmem %s3, %s256
      %s258 = smul.u32 32, %s19
      %p260 = scmp.eq.s32.totalorder %s21, 0
      // Predicated region
      $region33: #{convbn_forward.1} parent=31 // pred_check
        %p261 = pneg %p260
      $region34: #{convbn_forward.1} parent=31 // pred_check_branch
        %263 = sbr.rel (%p261) target = $region36
      $region35: #{convbn_forward.1} parent=31 // pred_region
        %v264 = vld [vmem:[%s249] sm:$0x1]
        %v266 = vlaneseq
        %v267 = vshrl.u32 %v266, 7
        %v268 = vsub.s32 0, %v267
        %v269 = vrot.slane %v264, %v268
        %271 = vst [vmem:[#allocation2] sm:$0xff] %v269
        %272 = vst [vmem:[#allocation2 + $0x8] sm:$0xff] %v269
        %273 = vst [vmem:[#allocation2 + $0x10] sm:$0xff] %v269
        %274 = vst [vmem:[#allocation2 + $0x18] sm:$0xff] %v269
        %275 = vst [vmem:[#allocation2 + $0x20] sm:$0xff] %v269
        %276 = vst [vmem:[#allocation2 + $0x28] sm:$0xff] %v269
        %277 = vst [vmem:[#allocation2 + $0x30] sm:$0xff] %v269
        %278 = vst [vmem:[#allocation2 + $0x38] sm:$0xff] %v269
        %279 = vst [vmem:[#allocation2 + $0x40] sm:$0xff] %v269
        %280 = vst [vmem:[#allocation2 + $0x48] sm:$0xff] %v269
        %281 = vst [vmem:[#allocation2 + $0x50] sm:$0xff] %v269
        %282 = vst [vmem:[#allocation2 + $0x58] sm:$0xff] %v269
        %283 = vst [vmem:[#allocation2 + $0x60] sm:$0xff] %v269
        %284 = vst [vmem:[#allocation2 + $0x68] sm:$0xff] %v269
        %285 = vst [vmem:[#allocation2 + $0x70] sm:$0xff] %v269
        %286 = vst [vmem:[#allocation2 + $0x78] sm:$0xff] %v269
        %287 = vst [vmem:[#allocation2 + $0x80] sm:$0xff] %v269
        %288 = vst [vmem:[#allocation2 + $0x88] sm:$0xff] %v269
        %289 = vst [vmem:[#allocation2 + $0x90] sm:$0xff] %v269
        %290 = vst [vmem:[#allocation2 + $0x98] sm:$0xff] %v269
        %291 = vst [vmem:[#allocation2 + $0xa0] sm:$0xff] %v269
        %292 = vst [vmem:[#allocation2 + $0xa8] sm:$0xff] %v269
        %293 = vst [vmem:[#allocation2 + $0xb0] sm:$0xff] %v269
        %294 = vst [vmem:[#allocation2 + $0xb8] sm:$0xff] %v269
        %295 = vst [vmem:[#allocation2 + $0xc0] sm:$0xff] %v269
        %296 = vst [vmem:[#allocation2 + $0xc8] sm:$0xff] %v269
        %297 = vst [vmem:[#allocation2 + $0xd0] sm:$0xff] %v269
        %298 = vst [vmem:[#allocation2 + $0xd8] sm:$0xff] %v269
        %299 = vst [vmem:[#allocation2 + $0xe0] sm:$0xff] %v269
        %300 = vst [vmem:[#allocation2 + $0xe8] sm:$0xff] %v269
        %301 = vst [vmem:[#allocation2 + $0xf0] sm:$0xff] %v269
        %302 = vst [vmem:[#allocation2 + $0xf8] sm:$0xff] %v269
      $region36: #{convbn_forward.1} parent=31 // pred_fallthru
        _
      %v303 = vld [vmem:[#allocation2] sm:$0xff]
      %v304 = vld [vmem:[#allocation2 + $0x8] sm:$0xff]
      %v305 = vld [vmem:[#allocation2 + $0x10] sm:$0xff]
      %v306 = vld [vmem:[#allocation2 + $0x18] sm:$0xff]
      %v307 = vld [vmem:[#allocation2 + $0x20] sm:$0xff]
      %v308 = vld [vmem:[#allocation2 + $0x28] sm:$0xff]
      %v309 = vld [vmem:[#allocation2 + $0x30] sm:$0xff]
      %v310 = vld [vmem:[#allocation2 + $0x38] sm:$0xff]
      %v311 = vld [vmem:[#allocation2 + $0x40] sm:$0xff]
      %v312 = vld [vmem:[#allocation2 + $0x48] sm:$0xff]
      %v313 = vld [vmem:[#allocation2 + $0x50] sm:$0xff]
      %v314 = vld [vmem:[#allocation2 + $0x58] sm:$0xff]
      %v315 = vld [vmem:[#allocation2 + $0x60] sm:$0xff]
      %v316 = vld [vmem:[#allocation2 + $0x68] sm:$0xff]
      %v317 = vld [vmem:[#allocation2 + $0x70] sm:$0xff]
      %v318 = vld [vmem:[#allocation2 + $0x78] sm:$0xff]
      %v319 = vld [vmem:[#allocation2 + $0x80] sm:$0xff]
      %v320 = vld [vmem:[#allocation2 + $0x88] sm:$0xff]
      %v321 = vld [vmem:[#allocation2 + $0x90] sm:$0xff]
      %v322 = vld [vmem:[#allocation2 + $0x98] sm:$0xff]
      %v323 = vld [vmem:[#allocation2 + $0xa0] sm:$0xff]
      %v324 = vld [vmem:[#allocation2 + $0xa8] sm:$0xff]
      %v325 = vld [vmem:[#allocation2 + $0xb0] sm:$0xff]
      %v326 = vld [vmem:[#allocation2 + $0xb8] sm:$0xff]
      %v327 = vld [vmem:[#allocation2 + $0xc0] sm:$0xff]
      %v328 = vld [vmem:[#allocation2 + $0xc8] sm:$0xff]
      %v329 = vld [vmem:[#allocation2 + $0xd0] sm:$0xff]
      %v330 = vld [vmem:[#allocation2 + $0xd8] sm:$0xff]
      %v331 = vld [vmem:[#allocation2 + $0xe0] sm:$0xff]
      %v332 = vld [vmem:[#allocation2 + $0xe8] sm:$0xff]
      %v333 = vld [vmem:[#allocation2 + $0xf0] sm:$0xff]
      %v334 = vld [vmem:[#allocation2 + $0xf8] sm:$0xff]
      %v335 = vld [vmem:[%s236] sm:$0xf]
      %v336 = vld [vmem:[%s236 + $0x4] sm:$0xf]
      %v337 = vld [vmem:[%s236 + $0x8] sm:$0xf]
      %v338 = vld [vmem:[%s236 + $0xc] sm:$0xf]
      %v339 = vld [vmem:[%s236 + $0x10] sm:$0xf]
      %v340 = vld [vmem:[%s236 + $0x14] sm:$0xf]
      %v341 = vld [vmem:[%s236 + $0x18] sm:$0xf]
      %v342 = vld [vmem:[%s236 + $0x1c] sm:$0xf]
      %v343 = vld [vmem:[%s236 + $0x20] sm:$0xf]
      %v344 = vld [vmem:[%s236 + $0x24] sm:$0xf]
      %v345 = vld [vmem:[%s236 + $0x28] sm:$0xf]
      %v346 = vld [vmem:[%s236 + $0x2c] sm:$0xf]
      %v347 = vld [vmem:[%s236 + $0x30] sm:$0xf]
      %v348 = vld [vmem:[%s236 + $0x34] sm:$0xf]
      %v349 = vld [vmem:[%s236 + $0x38] sm:$0xf]
      %v350 = vld [vmem:[%s236 + $0x3c] sm:$0xf]
      %v351 = vld [vmem:[%s236 + $0x40] sm:$0xf]
      %v352 = vld [vmem:[%s236 + $0x44] sm:$0xf]
      %v353 = vld [vmem:[%s236 + $0x48] sm:$0xf]
      %v354 = vld [vmem:[%s236 + $0x4c] sm:$0xf]
      %v355 = vld [vmem:[%s236 + $0x50] sm:$0xf]
      %v356 = vld [vmem:[%s236 + $0x54] sm:$0xf]
      %v357 = vld [vmem:[%s236 + $0x58] sm:$0xf]
      %v358 = vld [vmem:[%s236 + $0x5c] sm:$0xf]
      %v359 = vld [vmem:[%s236 + $0x60] sm:$0xf]
      %v360 = vld [vmem:[%s236 + $0x64] sm:$0xf]
      %v361 = vld [vmem:[%s236 + $0x68] sm:$0xf]
      %v362 = vld [vmem:[%s236 + $0x6c] sm:$0xf]
      %v363 = vld [vmem:[%s236 + $0x70] sm:$0xf]
      %v364 = vld [vmem:[%s236 + $0x74] sm:$0xf]
      %v365 = vld [vmem:[%s236 + $0x78] sm:$0xf]
      %v366 = vld [vmem:[%s236 + $0x7c] sm:$0xf]
      %v367 = vld [vmem:[%s245] sm:$0xf]
      %v368 = vld [vmem:[%s245 + $0x4] sm:$0xf]
      %v369 = vld [vmem:[%s245 + $0x8] sm:$0xf]
      %v370 = vld [vmem:[%s245 + $0xc] sm:$0xf]
      %v371 = vld [vmem:[%s245 + $0x10] sm:$0xf]
      %v372 = vld [vmem:[%s245 + $0x14] sm:$0xf]
      %v373 = vld [vmem:[%s245 + $0x18] sm:$0xf]
      %v374 = vld [vmem:[%s245 + $0x1c] sm:$0xf]
      %v375 = vld [vmem:[%s245 + $0x20] sm:$0xf]
      %v376 = vld [vmem:[%s245 + $0x24] sm:$0xf]
      %v377 = vld [vmem:[%s245 + $0x28] sm:$0xf]
      %v378 = vld [vmem:[%s245 + $0x2c] sm:$0xf]
      %v379 = vld [vmem:[%s245 + $0x30] sm:$0xf]
      %v380 = vld [vmem:[%s245 + $0x34] sm:$0xf]
      %v381 = vld [vmem:[%s245 + $0x38] sm:$0xf]
      %v382 = vld [vmem:[%s245 + $0x3c] sm:$0xf]
      %v415 = vunpack.c.l.b16 %v335
      %v416 = vunpack.c.l.b16 %v336
      %v417 = vunpack.c.l.b16 %v337
      %v418 = vunpack.c.l.b16 %v338
      %v419 = vunpack.c.l.b16 %v339
      %v420 = vunpack.c.l.b16 %v340
      %v421 = vunpack.c.l.b16 %v341
      %v422 = vunpack.c.l.b16 %v342
      %v423 = vunpack.c.l.b16 %v343
      %v424 = vunpack.c.l.b16 %v344
      %v425 = vunpack.c.l.b16 %v345
      %v426 = vunpack.c.l.b16 %v346
      %v427 = vunpack.c.l.b16 %v347
      %v428 = vunpack.c.l.b16 %v348
      %v429 = vunpack.c.l.b16 %v349
      %v430 = vunpack.c.l.b16 %v350
      %v431 = vunpack.c.l.b16 %v351
      %v432 = vunpack.c.l.b16 %v352
      %v433 = vunpack.c.l.b16 %v353
      %v434 = vunpack.c.l.b16 %v354
      %v435 = vunpack.c.l.b16 %v355
      %v436 = vunpack.c.l.b16 %v356
      %v437 = vunpack.c.l.b16 %v357
      %v438 = vunpack.c.l.b16 %v358
      %v439 = vunpack.c.l.b16 %v359
      %v440 = vunpack.c.l.b16 %v360
      %v441 = vunpack.c.l.b16 %v361
      %v442 = vunpack.c.l.b16 %v362
      %v443 = vunpack.c.l.b16 %v363
      %v444 = vunpack.c.l.b16 %v364
      %v445 = vunpack.c.l.b16 %v365
      %v446 = vunpack.c.l.b16 %v366
      %v447 = vpack.c.b16 %v416, %v415
      %v448 = vpack.c.b16 %v418, %v417
      %v449 = vpack.c.b16 %v420, %v419
      %v450 = vpack.c.b16 %v422, %v421
      %v451 = vpack.c.b16 %v424, %v423
      %v452 = vpack.c.b16 %v426, %v425
      %v453 = vpack.c.b16 %v428, %v427
      %v454 = vpack.c.b16 %v430, %v429
      %v455 = vpack.c.b16 %v432, %v431
      %v456 = vpack.c.b16 %v434, %v433
      %v457 = vpack.c.b16 %v436, %v435
      %v458 = vpack.c.b16 %v438, %v437
      %v459 = vpack.c.b16 %v440, %v439
      %v460 = vpack.c.b16 %v442, %v441
      %v461 = vpack.c.b16 %v444, %v443
      %v462 = vpack.c.b16 %v446, %v445
      %v495 = vunpack.c.l.b16 %v367
      %v496 = vunpack.c.l.b16 %v368
      %v497 = vunpack.c.l.b16 %v369
      %v498 = vunpack.c.l.b16 %v370
      %v499 = vunpack.c.l.b16 %v371
      %v500 = vunpack.c.l.b16 %v372
      %v501 = vunpack.c.l.b16 %v373
      %v502 = vunpack.c.l.b16 %v374
      %v503 = vunpack.c.l.b16 %v375
      %v504 = vunpack.c.l.b16 %v376
      %v505 = vunpack.c.l.b16 %v377
      %v506 = vunpack.c.l.b16 %v378
      %v507 = vunpack.c.l.b16 %v379
      %v508 = vunpack.c.l.b16 %v380
      %v509 = vunpack.c.l.b16 %v381
      %v510 = vunpack.c.l.b16 %v382
      %v511 = vpack.c.b16 %v496, %v495
      %v512 = vpack.c.b16 %v498, %v497
      %v513 = vpack.c.b16 %v500, %v499
      %v514 = vpack.c.b16 %v502, %v501
      %v515 = vpack.c.b16 %v504, %v503
      %v516 = vpack.c.b16 %v506, %v505
      %v517 = vpack.c.b16 %v508, %v507
      %v518 = vpack.c.b16 %v510, %v509
      %527 = vmatprep.subr.bf16.mxu0 0
      %528 = vmatpush1.bf16.msra.mxu0 %v511
      %529 = vmatprep.subr.bf16.mxu0 0
      %530 = vmatpush1.bf16.msra.mxu0 %v512
      %531 = vmatprep.subr.bf16.mxu0 0
      %532 = vmatpush1.bf16.msra.mxu0 %v513
      %533 = vmatprep.subr.bf16.mxu0 0
      %534 = vmatpush1.bf16.msra.mxu0 %v514
      %535 = vmatprep.subr.bf16.mxu0 0
      %536 = vmatpush1.bf16.msra.mxu0 %v515
      %537 = vmatprep.subr.bf16.mxu0 0
      %538 = vmatpush1.bf16.msra.mxu0 %v516
      %539 = vmatprep.subr.bf16.mxu0 0
      %540 = vmatpush1.bf16.msra.mxu0 %v517
      %541 = vmatprep.subr.bf16.mxu0 0
      %542 = vmatpush1.bf16.msra.mxu0 %v518
      %543 = vmatprep.subr.bf16.mxu0 0
      %544 = vmatpush1.bf16.msra.mxu0 0
      %545 = vmatprep.subr.bf16.mxu0 0
      %546 = vmatpush1.bf16.msra.mxu0 0
      %547 = vmatprep.subr.bf16.mxu0 0
      %548 = vmatpush1.bf16.msra.mxu0 0
      %549 = vmatprep.subr.bf16.mxu0 0
      %550 = vmatpush1.bf16.msra.mxu0 0
      %551 = vmatprep.subr.bf16.mxu0 0
      %552 = vmatpush1.bf16.msra.mxu0 0
      %553 = vmatprep.subr.bf16.mxu0 0
      %554 = vmatpush1.bf16.msra.mxu0 0
      %555 = vmatprep.subr.bf16.mxu0 0
      %556 = vmatpush1.bf16.msra.mxu0 0
      %557 = vmatprep.subr.bf16.mxu0 0
      %558 = vmatpush1.bf16.msra.mxu0 0
      %559 = vmatprep.mubr.bf16.mxu0 0
      %560 = vmatmul.mubr.bf16.gmra.mrb[0].mxu0 %v447
      %v561 = vpop.f32.mrb[0].mxu0
      %v562 = vadd.f32 0.0, %v561
      %v563 = vpop.f32.mrb[0].mxu0
      %v564 = vpop.f32.mrb[0].mxu0
      %v565 = vadd.f32 0.0, %v564
      %v566 = vpop.f32.mrb[0].mxu0
      %567 = vmatprep.mubr.bf16.mxu0 0
      %568 = vmatmul.mubr.bf16.gmra.mrb[0].mxu0 %v448
      %v569 = vpop.f32.mrb[0].mxu0
      %v570 = vadd.f32 0.0, %v569
      %v571 = vpop.f32.mrb[0].mxu0
      %v572 = vpop.f32.mrb[0].mxu0
      %v573 = vadd.f32 0.0, %v572
      %v574 = vpop.f32.mrb[0].mxu0
      %575 = vmatprep.mubr.bf16.mxu0 0
      %576 = vmatmul.mubr.bf16.gmra.mrb[0].mxu0 %v449
      %v577 = vpop.f32.mrb[0].mxu0
      %v578 = vadd.f32 0.0, %v577
      %v579 = vpop.f32.mrb[0].mxu0
      %v580 = vpop.f32.mrb[0].mxu0
      %v581 = vadd.f32 0.0, %v580
      %v582 = vpop.f32.mrb[0].mxu0
      %583 = vmatprep.mubr.bf16.mxu0 0
      %584 = vmatmul.mubr.bf16.gmra.mrb[0].mxu0 %v450
      %v585 = vpop.f32.mrb[0].mxu0
      %v586 = vadd.f32 0.0, %v585
      %v587 = vpop.f32.mrb[0].mxu0
      %v588 = vpop.f32.mrb[0].mxu0
      %v589 = vadd.f32 0.0, %v588
      %v590 = vpop.f32.mrb[0].mxu0
      %591 = vmatprep.mubr.bf16.mxu0 0
      %592 = vmatmul.mubr.bf16.gmra.mrb[0].mxu0 %v451
      %v593 = vpop.f32.mrb[0].mxu0
      %v594 = vadd.f32 0.0, %v593
      %v595 = vpop.f32.mrb[0].mxu0
      %v596 = vpop.f32.mrb[0].mxu0
      %v597 = vadd.f32 0.0, %v596
      %v598 = vpop.f32.mrb[0].mxu0
      %599 = vmatprep.mubr.bf16.mxu0 0
      %600 = vmatmul.mubr.bf16.gmra.mrb[0].mxu0 %v452
      %v601 = vpop.f32.mrb[0].mxu0
      %v602 = vadd.f32 0.0, %v601
      %v603 = vpop.f32.mrb[0].mxu0
      %v604 = vpop.f32.mrb[0].mxu0
      %v605 = vadd.f32 0.0, %v604
      %v606 = vpop.f32.mrb[0].mxu0
      %607 = vmatprep.mubr.bf16.mxu0 0
      %608 = vmatmul.mubr.bf16.gmra.mrb[0].mxu0 %v453
      %v609 = vpop.f32.mrb[0].mxu0
      %v610 = vadd.f32 0.0, %v609
      %v611 = vpop.f32.mrb[0].mxu0
      %v612 = vpop.f32.mrb[0].mxu0
      %v613 = vadd.f32 0.0, %v612
      %v614 = vpop.f32.mrb[0].mxu0
      %615 = vmatprep.mubr.bf16.mxu0 0
      %616 = vmatmul.mubr.bf16.gmra.mrb[0].mxu0 %v454
      %v617 = vpop.f32.mrb[0].mxu0
      %v618 = vadd.f32 0.0, %v617
      %v619 = vpop.f32.mrb[0].mxu0
      %v620 = vpop.f32.mrb[0].mxu0
      %v621 = vadd.f32 0.0, %v620
      %v622 = vpop.f32.mrb[0].mxu0
      %623 = vmatprep.mubr.bf16.mxu0 0
      %624 = vmatmul.mubr.bf16.gmra.mrb[0].mxu0 %v455
      %v625 = vpop.f32.mrb[0].mxu0
      %v626 = vadd.f32 0.0, %v625
      %v627 = vpop.f32.mrb[0].mxu0
      %v628 = vpop.f32.mrb[0].mxu0
      %v629 = vadd.f32 0.0, %v628
      %v630 = vpop.f32.mrb[0].mxu0
      %631 = vmatprep.mubr.bf16.mxu0 0
      %632 = vmatmul.mubr.bf16.gmra.mrb[0].mxu0 %v456
      %v633 = vpop.f32.mrb[0].mxu0
      %v634 = vadd.f32 0.0, %v633
      %v635 = vpop.f32.mrb[0].mxu0
      %v636 = vpop.f32.mrb[0].mxu0
      %v637 = vadd.f32 0.0, %v636
      %v638 = vpop.f32.mrb[0].mxu0
      %639 = vmatprep.mubr.bf16.mxu0 0
      %640 = vmatmul.mubr.bf16.gmra.mrb[0].mxu0 %v457
      %v641 = vpop.f32.mrb[0].mxu0
      %v642 = vadd.f32 0.0, %v641
      %v643 = vpop.f32.mrb[0].mxu0
      %v644 = vpop.f32.mrb[0].mxu0
      %v645 = vadd.f32 0.0, %v644
      %v646 = vpop.f32.mrb[0].mxu0
      %647 = vmatprep.mubr.bf16.mxu0 0
      %648 = vmatmul.mubr.bf16.gmra.mrb[0].mxu0 %v458
      %v649 = vpop.f32.mrb[0].mxu0
      %v650 = vadd.f32 0.0, %v649
      %v651 = vpop.f32.mrb[0].mxu0
      %v652 = vpop.f32.mrb[0].mxu0
      %v653 = vadd.f32 0.0, %v652
      %v654 = vpop.f32.mrb[0].mxu0
      %655 = vmatprep.mubr.bf16.mxu0 0
      %656 = vmatmul.mubr.bf16.gmra.mrb[0].mxu0 %v459
      %v657 = vpop.f32.mrb[0].mxu0
      %v658 = vadd.f32 0.0, %v657
      %v659 = vpop.f32.mrb[0].mxu0
      %v660 = vpop.f32.mrb[0].mxu0
      %v661 = vadd.f32 0.0, %v660
      %v662 = vpop.f32.mrb[0].mxu0
      %663 = vmatprep.mubr.bf16.mxu0 0
      %664 = vmatmul.mubr.bf16.gmra.mrb[0].mxu0 %v460
      %v665 = vpop.f32.mrb[0].mxu0
      %v666 = vadd.f32 0.0, %v665
      %v667 = vpop.f32.mrb[0].mxu0
      %v668 = vpop.f32.mrb[0].mxu0
      %v669 = vadd.f32 0.0, %v668
      %v670 = vpop.f32.mrb[0].mxu0
      %671 = vmatprep.mubr.bf16.mxu0 0
      %672 = vmatmul.mubr.bf16.gmra.mrb[0].mxu0 %v461
      %v673 = vpop.f32.mrb[0].mxu0
      %v674 = vadd.f32 0.0, %v673
      %v675 = vpop.f32.mrb[0].mxu0
      %v676 = vpop.f32.mrb[0].mxu0
      %v677 = vadd.f32 0.0, %v676
      %v678 = vpop.f32.mrb[0].mxu0
      %679 = vmatprep.mubr.bf16.mxu0 0
      %680 = vmatmul.mubr.bf16.gmra.mrb[0].mxu0 %v462
      %v681 = vpop.f32.mrb[0].mxu0
      %v682 = vadd.f32 0.0, %v681
      %v683 = vpop.f32.mrb[0].mxu0
      %v684 = vpop.f32.mrb[0].mxu0
      %v685 = vadd.f32 0.0, %v684
      %v686 = vpop.f32.mrb[0].mxu0
      %687 = vdwg.mxu0
      %v688 = vadd.f32 %v303, %v562
      %v689 = vadd.f32 %v304, %v565
      %v690 = vadd.f32 %v305, %v570
      %v691 = vadd.f32 %v306, %v573
      %v692 = vadd.f32 %v307, %v578
      %v693 = vadd.f32 %v308, %v581
      %v694 = vadd.f32 %v309, %v586
      %v695 = vadd.f32 %v310, %v589
      %v696 = vadd.f32 %v311, %v594
      %v697 = vadd.f32 %v312, %v597
      %v698 = vadd.f32 %v313, %v602
      %v699 = vadd.f32 %v314, %v605
      %v700 = vadd.f32 %v315, %v610
      %v701 = vadd.f32 %v316, %v613
      %v702 = vadd.f32 %v317, %v618
      %v703 = vadd.f32 %v318, %v621
      %v704 = vadd.f32 %v319, %v626
      %v705 = vadd.f32 %v320, %v629
      %v706 = vadd.f32 %v321, %v634
      %v707 = vadd.f32 %v322, %v637
      %v708 = vadd.f32 %v323, %v642
      %v709 = vadd.f32 %v324, %v645
      %v710 = vadd.f32 %v325, %v650
      %v711 = vadd.f32 %v326, %v653
      %v712 = vadd.f32 %v327, %v658
      %v713 = vadd.f32 %v328, %v661
      %v714 = vadd.f32 %v329, %v666
      %v715 = vadd.f32 %v330, %v669
      %v716 = vadd.f32 %v331, %v674
      %v717 = vadd.f32 %v332, %v677
      %v718 = vadd.f32 %v333, %v682
      %v719 = vadd.f32 %v334, %v685
      %720 = vst [vmem:[#allocation2] sm:$0xff] %v688
      %721 = vst [vmem:[#allocation2 + $0x8] sm:$0xff] %v689
      %722 = vst [vmem:[#allocation2 + $0x10] sm:$0xff] %v690
      %723 = vst [vmem:[#allocation2 + $0x18] sm:$0xff] %v691
      %724 = vst [vmem:[#allocation2 + $0x20] sm:$0xff] %v692
      %725 = vst [vmem:[#allocation2 + $0x28] sm:$0xff] %v693
      %726 = vst [vmem:[#allocation2 + $0x30] sm:$0xff] %v694
      %727 = vst [vmem:[#allocation2 + $0x38] sm:$0xff] %v695
      %728 = vst [vmem:[#allocation2 + $0x40] sm:$0xff] %v696
      %729 = vst [vmem:[#allocation2 + $0x48] sm:$0xff] %v697
      %730 = vst [vmem:[#allocation2 + $0x50] sm:$0xff] %v698
      %731 = vst [vmem:[#allocation2 + $0x58] sm:$0xff] %v699
      %732 = vst [vmem:[#allocation2 + $0x60] sm:$0xff] %v700
      %733 = vst [vmem:[#allocation2 + $0x68] sm:$0xff] %v701
      %734 = vst [vmem:[#allocation2 + $0x70] sm:$0xff] %v702
      %735 = vst [vmem:[#allocation2 + $0x78] sm:$0xff] %v703
      %736 = vst [vmem:[#allocation2 + $0x80] sm:$0xff] %v704
      %737 = vst [vmem:[#allocation2 + $0x88] sm:$0xff] %v705
      %738 = vst [vmem:[#allocation2 + $0x90] sm:$0xff] %v706
      %739 = vst [vmem:[#allocation2 + $0x98] sm:$0xff] %v707
      %740 = vst [vmem:[#allocation2 + $0xa0] sm:$0xff] %v708
      %741 = vst [vmem:[#allocation2 + $0xa8] sm:$0xff] %v709
      %742 = vst [vmem:[#allocation2 + $0xb0] sm:$0xff] %v710
      %743 = vst [vmem:[#allocation2 + $0xb8] sm:$0xff] %v711
      %744 = vst [vmem:[#allocation2 + $0xc0] sm:$0xff] %v712
      %745 = vst [vmem:[#allocation2 + $0xc8] sm:$0xff] %v713
      %746 = vst [vmem:[#allocation2 + $0xd0] sm:$0xff] %v714
      %747 = vst [vmem:[#allocation2 + $0xd8] sm:$0xff] %v715
      %748 = vst [vmem:[#allocation2 + $0xe0] sm:$0xff] %v716
      %749 = vst [vmem:[#allocation2 + $0xe8] sm:$0xff] %v717
      %750 = vst [vmem:[#allocation2 + $0xf0] sm:$0xff] %v718
      %751 = vst [vmem:[#allocation2 + $0xf8] sm:$0xff] %v719
      // Predicated region
      $region37: #{convbn_forward.1} parent=31 // pred_check
        %p752 = pneg %p260
      $region38: #{convbn_forward.1} parent=31 // pred_check_branch
        %754 = sbr.rel (%p752) target = $region40
      $region39: #{convbn_forward.1} parent=31 // pred_region
        %v755 = vld [vmem:[#allocation2] sm:$0xff]
        %v756 = vld [vmem:[#allocation2 + $0x8] sm:$0xff]
        %v757 = vld [vmem:[#allocation2 + $0x10] sm:$0xff]
        %v758 = vld [vmem:[#allocation2 + $0x18] sm:$0xff]
        %v759 = vld [vmem:[#allocation2 + $0x20] sm:$0xff]
        %v760 = vld [vmem:[#allocation2 + $0x28] sm:$0xff]
        %v761 = vld [vmem:[#allocation2 + $0x30] sm:$0xff]
        %v762 = vld [vmem:[#allocation2 + $0x38] sm:$0xff]
        %v763 = vld [vmem:[#allocation2 + $0x40] sm:$0xff]
        %v764 = vld [vmem:[#allocation2 + $0x48] sm:$0xff]
        %v765 = vld [vmem:[#allocation2 + $0x50] sm:$0xff]
        %v766 = vld [vmem:[#allocation2 + $0x58] sm:$0xff]
        %v767 = vld [vmem:[#allocation2 + $0x60] sm:$0xff]
        %v768 = vld [vmem:[#allocation2 + $0x68] sm:$0xff]
        %v769 = vld [vmem:[#allocation2 + $0x70] sm:$0xff]
        %v770 = vld [vmem:[#allocation2 + $0x78] sm:$0xff]
        %v771 = vld [vmem:[#allocation2 + $0x80] sm:$0xff]
        %v772 = vld [vmem:[#allocation2 + $0x88] sm:$0xff]
        %v773 = vld [vmem:[#allocation2 + $0x90] sm:$0xff]
        %v774 = vld [vmem:[#allocation2 + $0x98] sm:$0xff]
        %v775 = vld [vmem:[#allocation2 + $0xa0] sm:$0xff]
        %v776 = vld [vmem:[#allocation2 + $0xa8] sm:$0xff]
        %v777 = vld [vmem:[#allocation2 + $0xb0] sm:$0xff]
        %v778 = vld [vmem:[#allocation2 + $0xb8] sm:$0xff]
        %v779 = vld [vmem:[#allocation2 + $0xc0] sm:$0xff]
        %v780 = vld [vmem:[#allocation2 + $0xc8] sm:$0xff]
        %v781 = vld [vmem:[#allocation2 + $0xd0] sm:$0xff]
        %v782 = vld [vmem:[#allocation2 + $0xd8] sm:$0xff]
        %v783 = vld [vmem:[#allocation2 + $0xe0] sm:$0xff]
        %v784 = vld [vmem:[#allocation2 + $0xe8] sm:$0xff]
        %v785 = vld [vmem:[#allocation2 + $0xf0] sm:$0xff]
        %v786 = vld [vmem:[#allocation2 + $0xf8] sm:$0xff]
        %787 = vst [vmem:[%s257] sm:$0xff] %v755
        %788 = vst [vmem:[%s257 + $0x8] sm:$0xff] %v756
        %789 = vst [vmem:[%s257 + $0x10] sm:$0xff] %v757
        %790 = vst [vmem:[%s257 + $0x18] sm:$0xff] %v758
        %791 = vst [vmem:[%s257 + $0x20] sm:$0xff] %v759
        %792 = vst [vmem:[%s257 + $0x28] sm:$0xff] %v760
        %793 = vst [vmem:[%s257 + $0x30] sm:$0xff] %v761
        %794 = vst [vmem:[%s257 + $0x38] sm:$0xff] %v762
        %795 = vst [vmem:[%s257 + $0x40] sm:$0xff] %v763
        %796 = vst [vmem:[%s257 + $0x48] sm:$0xff] %v764
        %797 = vst [vmem:[%s257 + $0x50] sm:$0xff] %v765
        %798 = vst [vmem:[%s257 + $0x58] sm:$0xff] %v766
        %799 = vst [vmem:[%s257 + $0x60] sm:$0xff] %v767
        %800 = vst [vmem:[%s257 + $0x68] sm:$0xff] %v768
        %801 = vst [vmem:[%s257 + $0x70] sm:$0xff] %v769
        %802 = vst [vmem:[%s257 + $0x78] sm:$0xff] %v770
        %803 = vst [vmem:[%s257 + $0x80] sm:$0xff] %v771
        %804 = vst [vmem:[%s257 + $0x88] sm:$0xff] %v772
        %805 = vst [vmem:[%s257 + $0x90] sm:$0xff] %v773
        %806 = vst [vmem:[%s257 + $0x98] sm:$0xff] %v774
        %807 = vst [vmem:[%s257 + $0xa0] sm:$0xff] %v775
        %808 = vst [vmem:[%s257 + $0xa8] sm:$0xff] %v776
        %809 = vst [vmem:[%s257 + $0xb0] sm:$0xff] %v777
        %810 = vst [vmem:[%s257 + $0xb8] sm:$0xff] %v778
        %811 = vst [vmem:[%s257 + $0xc0] sm:$0xff] %v779
        %812 = vst [vmem:[%s257 + $0xc8] sm:$0xff] %v780
        %813 = vst [vmem:[%s257 + $0xd0] sm:$0xff] %v781
        %814 = vst [vmem:[%s257 + $0xd8] sm:$0xff] %v782
        %815 = vst [vmem:[%s257 + $0xe0] sm:$0xff] %v783
        %816 = vst [vmem:[%s257 + $0xe8] sm:$0xff] %v784
        %817 = vst [vmem:[%s257 + $0xf0] sm:$0xff] %v785
        %818 = vst [vmem:[%s257 + $0xf8] sm:$0xff] %v786
      $region40: #{convbn_forward.1} parent=31 // pred_fallthru
        _
      %s819 = smul.u32 32, %s19
      %p820 = scmp.lt.s32.totalorder %s819, 63
      %s821 = scalar_select %p820, %s819, 63
      %p822 = scmp.lt.s32.totalorder %s20, 0
      %s823 = scalar_select %p822, %s20, 0
      %s824 = sadd.s32 %s823, %s821
      %s825 = smul.addr %s824, 8
      %s826 = scalar_lea.vmem %s3, %s825
      // Predicated region
      $region41: #{convbn_forward.1} parent=31 // pred_check
        %p827 = pneg %p135
      $region42: #{convbn_forward.1} parent=31 // pred_check_branch
        %829 = sbr.rel (%p827) target = $region44
      $region43: #{convbn_forward.1} parent=31 // pred_region
        %s830 = smul.u32 32, %s19
      $region44: #{convbn_forward.1} parent=31 // pred_fallthru
        _
    $region32: #{convbn_forward.1} parent=5 // pred_fallthru
      _
    %p831 = scmp.le.s32.totalorder 2, %s9
    // Predicated region
    $region45: #{convbn_forward.1} parent=5 // pred_check
      %p832 = pneg %p831
    $region46: #{convbn_forward.1} parent=5 // pred_check_branch
      %834 = sbr.rel (%p832) target = $region48
    $region47: #{convbn_forward.1} parent=5 // pred_region
      %s835 = ssub.s32 %s9, 2
      // Predicated region
      $region49: #{convbn_forward.1} parent=47 // pred_check
        %p836 = pneg %p141
      $region50: #{convbn_forward.1} parent=47 // pred_check_branch
        %838 = sbr.rel (%p836) target = $region52
      $region51: #{convbn_forward.1} parent=47 // pred_region
        %s839 = smul.u32 32, %s22
        %p840 = scmp.lt.s32.totalorder %s839, 63
        %s841 = scalar_select %p840, %s839, 63
        %p842 = scmp.lt.s32.totalorder %s23, 0
        %s843 = scalar_select %p842, %s23, 0
        %s844 = sadd.s32 %s843, %s841
        %s845 = smul.addr %s844, 8
        %s846 = scalar_lea.vmem %s3, %s845
      $region52: #{convbn_forward.1} parent=47 // pred_fallthru
        _
    $region48: #{convbn_forward.1} parent=5 // pred_fallthru
      _
  $region6: #{convbn_forward.1} parent=0 // loop_footer
    %s13 = sadd.s32 1, %s9
  $region7: #{convbn_forward.1} parent=0 // loop_footer_branch
    %8 = sbr.rel target = $region3
  $region8: #{convbn_forward.1} parent=0 // loop_exit
    _

</llo_original>
